<compile_context>
chip_gen: v7x
topology: tpu7x:2x2x1
jax: 0.10.0
libtpu: 0.0.40
codegen_flags: <defaults>
</compile_context>

<pallas_src>
import jax
import jax.numpy as jnp
from jax.experimental import pallas as pl
from jax.experimental.pallas import tpu as pltpu


def _round_up(x, m):
    return ((x + m - 1) // m) * m


def film_kernel(h_ref, y_ref, w_ref, b_ref, o_ref):
    f = o_ref.shape[-1]  # padded feature dim (multiple of 128)
    # Fused gamma/beta matmul on the MXU: (TB, L) x (L, 2F) -> (TB, 2F), f32 acc.
    gb = jnp.dot(y_ref[...], w_ref[...], preferred_element_type=jnp.float32)
    gb = gb + b_ref[...]                       # single (1, 2F) broadcast bias add
    g = gb[:, :f]                              # lane-aligned split (f % 128 == 0)
    b = gb[:, f:]
    # FiLM modulation: f32 FMA on the VPU, cast back to the output dtype.
    o_ref[...] = (g * h_ref[...].astype(jnp.float32) + b).astype(o_ref.dtype)


def prepare_film_params(wg, bg, wb, bb, *, matmul_dtype=None):
    """Fuse the two Linear layers into one weight/bias pair (do this ONCE).

    wg, wb: (F, L) PyTorch Linear weights (out, in); bg, bb: (F,) biases.
    Returns w_cat: (L, 2*Fp), b_cat: (1, 2*Fp) with Fp = round_up(F, 128) so the
    in-kernel gamma/beta split and the output store stay lane-aligned.
    """
    F, _ = wg.shape
    Fp = _round_up(F, 128)

    def pad_w(w):  # (F, L) -> (Fp, L); zero rows produce zero gamma/beta columns
        return jnp.pad(w, ((0, Fp - F), (0, 0))) if Fp != F else w

    def pad_b(b):
        return jnp.pad(b, (0, Fp - F)) if Fp != F else b

    w_cat = jnp.concatenate([pad_w(wg).T, pad_w(wb).T], axis=1)          # (L, 2*Fp)
    b_cat = jnp.concatenate([pad_b(bg), pad_b(bb)]).reshape(1, 2 * Fp)   # (1, 2*Fp)
    if matmul_dtype is not None:
        w_cat = w_cat.astype(matmul_dtype)                               # bf16 on v6e/v7x
    b_cat = b_cat.astype(jnp.float32)                                    # added to f32 acc
    return w_cat, b_cat


def _choose_batch_tile(B, Fp, L, *, max_tb=2048, target_programs=4,
                       vmem_budget_bytes=24 * 1024 * 1024):
    """Largest 8-aligned batch tile fitting the VMEM budget, capped at max_tb.

    Budget = double-buffered h/y/out tiles (f32 worst case) + the f32 (tb, 2F)
    gamma/beta intermediate.  If the batch is large enough, shrink so the grid
    has >= target_programs steps (feeds both v7x TensorCores; harmless on
    single-TC v5e/v6e).
    """
    b_pad8 = _round_up(B, 8)
    row_bytes = 2 * 4 * (2 * Fp + L) + 4 * 2 * Fp
    tb_vmem = max(8, (vmem_budget_bytes // row_bytes) // 8 * 8)
    tb = min(max_tb, tb_vmem, b_pad8)
    if b_pad8 // tb < target_programs and b_pad8 >= target_programs * 8:
        tb = max(8, _round_up(-(-b_pad8 // target_programs), 8))
    return tb


def film(h, y, w_cat, b_cat, *, matmul_dtype=None, interpret=False):
    """FiLM forward: out = (y @ Wg^T + bg) * h + (y @ Wb^T + bb).

    h: (B, F), y: (B, L); w_cat/b_cat from `prepare_film_params`.
    """
    B, F = h.shape
    L = y.shape[1]
    two_fp = w_cat.shape[1]
    Fp = two_fp // 2

    tb = _choose_batch_tile(B, Fp, L)
    n_prog = -(-B // tb)          # cdiv
    B_pad = n_prog * tb

    # Pad batch (and feature dim, if F was rounded up) in the wrapper; padded
    # rows/columns are computed on zeros and discarded by the final slice.
    hp = h
    if Fp != F or B_pad != B:
        hp = jnp.pad(h, ((0, B_pad - B), (0, Fp - F)))
    yp = y if B_pad == B else jnp.pad(y, ((0, B_pad - B), (0, 0)))
    if matmul_dtype is not None:
        yp = yp.astype(matmul_dtype)

    out = pl.pallas_call(
        film_kernel,
        out_shape=jax.ShapeDtypeStruct((B_pad, Fp), h.dtype),
        grid_spec=pl.GridSpec(
            grid=(n_prog,),
            in_specs=[
                pl.BlockSpec((tb, Fp), lambda i: (i, 0)),        # h     (streamed)
                pl.BlockSpec((tb, L), lambda i: (i, 0)),         # y     (streamed)
                pl.BlockSpec((L, two_fp), lambda i: (0, 0)),     # W_cat (resident)
                pl.BlockSpec((1, two_fp), lambda i: (0, 0)),     # b_cat (resident)
            ],
            out_specs=pl.BlockSpec((tb, Fp), lambda i: (i, 0)),
        ),
        compiler_params=pltpu.CompilerParams(
            # Batch tiles are independent. On v7x, pltpu.CORE_PARALLEL would
            # additionally shard this axis across both TensorCores; PARALLEL is
            # the portable choice that is safe on v5e/v6e/v7x.
            dimension_semantics=(pltpu.PARALLEL,),
            # Headroom for large batch tiles: v5e's default scoped VMEM is only
            # 16 MiB; 48 MiB stays under every chip's physical VMEM (v7x: 64 MiB
            # per TensorCore).
            vmem_limit_bytes=48 * 1024 * 1024,
        ),
        interpret=interpret,
    )(hp, yp, w_cat, b_cat)

    if Fp != F or B_pad != B:
        out = out[:B, :F]
    return out


if __name__ == "__main__":
    B = 8            # batch
    F = 128          # feature_dim
    L = 32           # label_dim

    key = jax.random.PRNGKey(0)
    k_h, k_y, k_wg, k_bg, k_wb, k_bb = jax.random.split(key, 6)

    h = jax.random.normal(k_h, (B, F), dtype=jnp.float32)
    y = jax.random.normal(k_y, (B, L), dtype=jnp.float32)

    # PyTorch stores Linear weight as (out, in) = (F, L); keep that convention.
    wg = jax.random.normal(k_wg, (F, L), dtype=jnp.float32) * 0.05
    bg = jax.random.normal(k_bg, (F,), dtype=jnp.float32) * 0.05
    wb = jax.random.normal(k_wb, (F, L), dtype=jnp.float32) * 0.05
    bb = jax.random.normal(k_bb, (F,), dtype=jnp.float32) * 0.05

    # Reference in plain JAX (same math as the PyTorch module).
    ref = (y @ wg.T + bg) * h + (y @ wb.T + bb)

    # f32 path (default): tight tolerance against the reference.
    w_cat, b_cat = prepare_film_params(wg, bg, wb, bb)
    out = jax.block_until_ready(film(h, y, w_cat, b_cat))
    assert out.shape == (B, F)
    assert jnp.allclose(out, ref, atol=1e-4, rtol=1e-4)

    # bf16-operand path (v6e/v7x matmul-friendly, f32 accumulation): loose tol.
    w16, b16 = prepare_film_params(wg, bg, wb, bb, matmul_dtype=jnp.bfloat16)
    out16 = jax.block_until_ready(film(h, y, w16, b16, matmul_dtype=jnp.bfloat16))
    assert out16.shape == (B, F)
    assert jnp.allclose(out16, ref, atol=3e-2, rtol=3e-2)

    print("KERNEL_OK")
</pallas_src>

<mosaic_0001>
module attributes {stable_mosaic.version = 11 : i64} {
  func.func @film_kernel(%arg0: i32, %arg1: memref<8x128xf32, #tpu.memory_space<vmem>>, %arg2: memref<8x32xf32, #tpu.memory_space<vmem>>, %arg3: memref<32x256xf32, #tpu.memory_space<vmem>>, %arg4: memref<1x256xf32, #tpu.memory_space<vmem>>, %arg5: memref<8x128xf32, #tpu.memory_space<vmem>>) attributes {dimension_semantics = [#tpu.dimension_semantics<parallel>], iteration_bounds = array<i64: 1>, scalar_prefetch = 0 : i64, scratch_operands = 0 : i64, tpu.core_type = #tpu.core_type<tc>, window_params = [{transform_indices = @transform_0, window_bounds = array<i64: 8, 128>}, {transform_indices = @transform_1, window_bounds = array<i64: 8, 32>}, {pipeline_mode = #tpu.pipeline_mode<synchronous>, transform_indices = @transform_2, window_bounds = array<i64: 32, 256>}, {pipeline_mode = #tpu.pipeline_mode<synchronous>, transform_indices = @transform_3, window_bounds = array<i64: 1, 256>}, {transform_indices = @transform_4, window_bounds = array<i64: 8, 128>}]} {
    %c0 = arith.constant 0 : index
    %c0_0 = arith.constant 0 : index
    %0 = vector.load %arg2[%c0, %c0_0] : memref<8x32xf32, #tpu.memory_space<vmem>>, vector<8x32xf32>
    %c0_1 = arith.constant 0 : index
    %c0_2 = arith.constant 0 : index
    %1 = vector.load %arg3[%c0_1, %c0_2] : memref<32x256xf32, #tpu.memory_space<vmem>>, vector<32x256xf32>
    %cst = arith.constant dense<0.000000e+00> : vector<8x256xf32>
    %2 = tpu.matmul %0, %1, %cst {dimension_numbers = #tpu.dot_dimension_numbers<[1], [0], [0], [1], [0, 0, 1, 1], [], []>} : vector<8x32xf32>, vector<32x256xf32>, vector<8x256xf32> -> vector<8x256xf32>
    %c0_3 = arith.constant 0 : index
    %c0_4 = arith.constant 0 : index
    %3 = vector.load %arg4[%c0_3, %c0_4] : memref<1x256xf32, #tpu.memory_space<vmem>>, vector<1x256xf32>
    %4 = vector.broadcast %3 : vector<1x256xf32> to vector<8x256xf32>
    %5 = arith.addf %2, %4 : vector<8x256xf32>
    %6 = vector.extract_strided_slice %5 {offsets = [0, 0], sizes = [8, 128], strides = [1, 1]} : vector<8x256xf32> to vector<8x128xf32>
    %7 = vector.extract_strided_slice %5 {offsets = [0, 128], sizes = [8, 128], strides = [1, 1]} : vector<8x256xf32> to vector<8x128xf32>
    %c0_5 = arith.constant 0 : index
    %c0_6 = arith.constant 0 : index
    %8 = vector.load %arg1[%c0_5, %c0_6] : memref<8x128xf32, #tpu.memory_space<vmem>>, vector<8x128xf32>
    %9 = arith.mulf %6, %8 : vector<8x128xf32>
    %10 = arith.addf %9, %7 : vector<8x128xf32>
    %c0_7 = arith.constant 0 : index
    %c0_8 = arith.constant 0 : index
    %11 = vector.load %arg5[%c0_7, %c0_8] : memref<8x128xf32, #tpu.memory_space<vmem>>, vector<8x128xf32>
    tpu.vector_store %arg5[%c0_7, %c0_8], %10 {strides = array<i32>} : memref<8x128xf32, #tpu.memory_space<vmem>>, vector<8x128xf32>,
    return
  }
  func.func @transform_0(%arg0: i32) -> (i32, i32) {
    %c0_i32 = arith.constant 0 : i32
    %c0_i32_0 = arith.constant 0 : i32
    return %arg0, %c0_i32 : i32, i32
  }
  func.func @transform_1(%arg0: i32) -> (i32, i32) {
    %c0_i32 = arith.constant 0 : i32
    %c0_i32_0 = arith.constant 0 : i32
    return %arg0, %c0_i32 : i32, i32
  }
  func.func @transform_2(%arg0: i32) -> (i32, i32) {
    %c0_i32 = arith.constant 0 : i32
    %c0_i32_0 = arith.constant 0 : i32
    %c0_i32_1 = arith.constant 0 : i32
    return %c0_i32, %c0_i32_0 : i32, i32
  }
  func.func @transform_3(%arg0: i32) -> (i32, i32) {
    %c0_i32 = arith.constant 0 : i32
    %c0_i32_0 = arith.constant 0 : i32
    %c0_i32_1 = arith.constant 0 : i32
    return %c0_i32, %c0_i32_0 : i32, i32
  }
  func.func @transform_4(%arg0: i32) -> (i32, i32) {
    %c0_i32 = arith.constant 0 : i32
    %c0_i32_0 = arith.constant 0 : i32
    return %arg0, %c0_i32 : i32, i32
  }
}

</mosaic_0001>

<llo_original>
// kernel: tpu_custom_call.1
$region0: #{tpu_custom_call.1}
  #allocation0 [shape = 'u32[]', space=smem, size = 0x4, offset = 0x4, fixed_abs, tag = 'smem constant byte address 0x4 - core index']
  #allocation1 [shape = 'u32[144,128]{1,0:T(1,128)}', space=vmem, size = 0x12000, scoped, tag = 'internal scratch']
  %s0 = inlined_call_operand.hbm [shape: f32[8,128], index: 0, kind: input, shape index: {}]
  %s1 = inlined_call_operand.hbm [shape: f32[8,32], index: 1, kind: input, shape index: {}]
  %s2 = inlined_call_operand.hbm [shape: f32[32,256], index: 2, kind: input, shape index: {}]
  %s3 = inlined_call_operand.vmem [shape: f32[1,256], index: 3, kind: input, shape index: {}]
  %s4 = inlined_call_operand.hbm [shape: f32[8,128], index: 4, kind: output, shape index: {}]
  %s5 = sld [smem:[#allocation0]]
  $region38: #{tpu_custom_call.1} parent=0
    _
  %s7 = ssub.s32 1, %s5
  %s8 = scalar_select 0, %s7, %s5
  $region1: #{tpu_custom_call.1} parent=0
    #allocation2 [shape = 'u8[4096]{0}', space=vmem, size = 0x1000, scoped, tag = 'input window, operand 0, single buffered']
    #allocation3 [shape = 's32[1]{0}', space=sflag, size = 0x4, scoped, tag = 'scoped memory for tpu_custom_call.1']
    #allocation4 [shape = 's32[1]{0}', space=sflag, size = 0x4, scoped, tag = 'scoped memory for tpu_custom_call.1']
    #allocation5 [shape = 'u8[4096]{0}', space=vmem, size = 0x1000, scoped, tag = 'input window, operand 1, single buffered']
    #allocation6 [shape = 's32[1]{0}', space=sflag, size = 0x4, scoped, tag = 'scoped memory for tpu_custom_call.1']
    #allocation7 [shape = 'u8[32768]{0}', space=vmem, size = 0x8000, scoped, tag = 'input window, operand 2, single buffered']
    #allocation8 [shape = 'u8[4096]{0}', space=vmem, size = 0x1000, scoped, tag = 'output window, operand 0, single buffered']
    %9 = vsyncpa [#allocation3], 0
    %10 = vsyncpa [#allocation6], 0
    %11 = vsyncpa [#allocation4], 0
    // Predicated region
    $region2: #{tpu_custom_call.1} parent=1 // pred_check
      _
    $region3: #{tpu_custom_call.1} parent=1 // pred_check_branch
      %13 = sbr.rel (0) target = $region5
    $region4: #{tpu_custom_call.1} parent=1 // pred_region
      %s15 = ssub.s32 128, 128
      %16 = vsyncadd [#allocation3], %s15
      %s18 = sshll.u32 [#allocation2], 4
      %s19 = int_to_ptr.vmem [resolvable:$true] %s18
      %21 = dma.hbm_to_vmem [thread:$0]  %s0, 128, %s19, [#allocation3]
    $region5: #{tpu_custom_call.1} parent=1 // pred_fallthru
      _
    // Predicated region
    $region6: #{tpu_custom_call.1} parent=1 // pred_check
      _
    $region7: #{tpu_custom_call.1} parent=1 // pred_check_branch
      %23 = sbr.rel (0) target = $region9
    $region8: #{tpu_custom_call.1} parent=1 // pred_region
      %s25 = ssub.s32 128, 128
      %26 = vsyncadd [#allocation6], %s25
      %s28 = sshll.u32 [#allocation5], 4
      %s29 = int_to_ptr.vmem [resolvable:$true] %s28
      %31 = dma.hbm_to_vmem [thread:$0]  %s1, 128, %s29, [#allocation6]
    $region9: #{tpu_custom_call.1} parent=1 // pred_fallthru
      _
    // Predicated region
    $region10: #{tpu_custom_call.1} parent=1 // pred_check
      _
    $region11: #{tpu_custom_call.1} parent=1 // pred_check_branch
      %33 = sbr.rel (0) target = $region13
    $region12: #{tpu_custom_call.1} parent=1 // pred_region
      %s35 = ssub.s32 1024, 1024
      %36 = vsyncadd [#allocation6], %s35
      %s37 = sshll.u32 [#allocation7], 4
      %s38 = int_to_ptr.vmem [resolvable:$true] %s37
      %43 = dma.hbm_to_vmem [thread:$0]  %s2, 1024, %s38, [#allocation6], 256, 256, 16
    $region13: #{tpu_custom_call.1} parent=1 // pred_fallthru
      _
    // Predicated region
    $region14: #{tpu_custom_call.1} parent=1 // pred_check
      _
    $region15: #{tpu_custom_call.1} parent=1 // pred_check_branch
      %45 = sbr.rel (0) target = $region17
    $region16: #{tpu_custom_call.1} parent=1 // pred_region
      _
    $region17: #{tpu_custom_call.1} parent=1 // pred_fallthru
      _
    // Predicated region
    $region18: #{tpu_custom_call.1} parent=1 // pred_check
      _
    $region19: #{tpu_custom_call.1} parent=1 // pred_check_branch
      %47 = sbr.rel (0) target = $region21
    $region20: #{tpu_custom_call.1} parent=1 // pred_region
      %48 = dma.done [#allocation3], 128
    $region21: #{tpu_custom_call.1} parent=1 // pred_fallthru
      _
    // Predicated region
    $region22: #{tpu_custom_call.1} parent=1 // pred_check
      _
    $region23: #{tpu_custom_call.1} parent=1 // pred_check_branch
      %50 = sbr.rel (0) target = $region25
    $region24: #{tpu_custom_call.1} parent=1 // pred_region
      %51 = dma.done [#allocation6], 128
    $region25: #{tpu_custom_call.1} parent=1 // pred_fallthru
      _
    // Predicated region
    $region26: #{tpu_custom_call.1} parent=1 // pred_check
      _
    $region27: #{tpu_custom_call.1} parent=1 // pred_check_branch
      %53 = sbr.rel (0) target = $region29
    $region28: #{tpu_custom_call.1} parent=1 // pred_region
      %54 = dma.done [#allocation6], 1024
    $region29: #{tpu_custom_call.1} parent=1 // pred_fallthru
      _
    %v55 = vld [vmem:[#allocation5] sm:$0xff]
    %v56 = vld [vmem:[#allocation7] sm:$0xff]
    %v57 = vld [vmem:[#allocation7 + $0x8] sm:$0xff]
    %v58 = vld [vmem:[#allocation7 + $0x10] sm:$0xff]
    %v59 = vld [vmem:[#allocation7 + $0x18] sm:$0xff]
    %v60 = vld [vmem:[#allocation7 + $0x20] sm:$0xff]
    %v61 = vld [vmem:[#allocation7 + $0x28] sm:$0xff]
    %v62 = vld [vmem:[#allocation7 + $0x30] sm:$0xff]
    %v63 = vld [vmem:[#allocation7 + $0x38] sm:$0xff]
    %v64 = vld [vmem:[%s3] sm:$0x3]
    %v66 = vlaneseq
    %v67 = vshrl.u32 %v66, 7
    %v68 = vsub.s32 0, %v67
    %v69 = vrot.slane %v64, %v68
    %v70 = vlaneseq
    %v71 = vshrl.u32 %v70, 7
    %v72 = vsub.s32 1, %v71
    %v73 = vrot.slane %v64, %v72
    %vm76 = vcmask 261120
    %v78 = vsel %vm76, %v55, 0
    %80 = vmatprep.subr.mxu0 %v57
    %81 = vmatpush1.msra.mxu0 %v56
    %82 = vmatprep.subr.mxu0 %v59
    %83 = vmatpush1.msra.mxu0 %v58
    %84 = vmatprep.subr.mxu0 %v61
    %85 = vmatpush1.msra.mxu0 %v60
    %86 = vmatprep.subr.mxu0 %v63
    %87 = vmatpush1.msra.mxu0 %v62
    %88 = vmatprep.subr.mxu0 0.0
    %89 = vmatpush1.msra.mxu0 0.0
    %90 = vmatprep.subr.mxu0 0.0
    %91 = vmatpush1.msra.mxu0 0.0
    %92 = vmatprep.subr.mxu0 0.0
    %93 = vmatpush1.msra.mxu0 0.0
    %94 = vmatprep.subr.mxu0 0.0
    %95 = vmatpush1.msra.mxu0 0.0
    %96 = vmatprep.subr.mxu0 0.0
    %97 = vmatpush1.msra.mxu0 0.0
    %98 = vmatprep.subr.mxu0 0.0
    %99 = vmatpush1.msra.mxu0 0.0
    %100 = vmatprep.subr.mxu0 0.0
    %101 = vmatpush1.msra.mxu0 0.0
    %102 = vmatprep.subr.mxu0 0.0
    %103 = vmatpush1.msra.mxu0 0.0
    %104 = vmatprep.subr.mxu0 0.0
    %105 = vmatpush1.msra.mxu0 0.0
    %106 = vmatprep.subr.mxu0 0.0
    %107 = vmatpush1.msra.mxu0 0.0
    %108 = vmatprep.subr.mxu0 0.0
    %109 = vmatpush1.msra.mxu0 0.0
    %110 = vmatprep.subr.mxu0 0.0
    %111 = vmatpush1.msra.mxu0 0.0
    %112 = vmatprep.subr.mxu0 0.0
    %113 = vmatpush1.msra.mxu0 0.0
    %114 = vmatprep.subr.mxu0 0.0
    %115 = vmatpush1.msra.mxu0 0.0
    %116 = vmatprep.subr.mxu0 0.0
    %117 = vmatpush1.msra.mxu0 0.0
    %118 = vmatprep.subr.mxu0 0.0
    %119 = vmatpush1.msra.mxu0 0.0
    %120 = vmatprep.subr.mxu0 0.0
    %121 = vmatpush1.msra.mxu0 0.0
    %122 = vmatprep.subr.mxu0 0.0
    %123 = vmatpush1.msra.mxu0 0.0
    %124 = vmatprep.subr.mxu0 0.0
    %125 = vmatpush1.msra.mxu0 0.0
    %126 = vmatprep.subr.mxu0 0.0
    %127 = vmatpush1.msra.mxu0 0.0
    %128 = vmatprep.subr.mxu0 0.0
    %129 = vmatpush1.msra.mxu0 0.0
    %130 = vmatprep.subr.mxu0 0.0
    %131 = vmatpush1.msra.mxu0 0.0
    %132 = vmatprep.subr.mxu0 0.0
    %133 = vmatpush1.msra.mxu0 0.0
    %134 = vmatprep.subr.mxu0 0.0
    %135 = vmatpush1.msra.mxu0 0.0
    %136 = vmatprep.subr.mxu0 0.0
    %137 = vmatpush1.msra.mxu0 0.0
    %138 = vmatprep.subr.mxu0 0.0
    %139 = vmatpush1.msra.mxu0 0.0
    %140 = vmatprep.subr.mxu0 0.0
    %141 = vmatpush1.msra.mxu0 0.0
    %142 = vmatprep.subr.mxu0 0.0
    %143 = vmatpush1.msra.mxu0 0.0
    %144 = vmatprep.mubr.f32.mxu0 0.0
    %145 = vmatmul.mubr.f32.gmra.mrb[0].mxu0 %v78
    %v146 = vpop.f32.mrb[0].mxu0
    %v147 = vadd.f32 %v69, %v146
    %v148 = vpop.f32.mrb[0].mxu0
    %v149 = vadd.f32 %v73, %v148
    %150 = vdwg.mxu0
    %v151 = vld [vmem:[#allocation2] sm:$0xff]
    %v152 = vmul.f32 %v147, %v151
    %v153 = vadd.f32 %v152, %v149
    %154 = vst [vmem:[#allocation8] sm:$0xff] %v153
    // Predicated region
    $region30: #{tpu_custom_call.1} parent=1 // pred_check
      _
    $region31: #{tpu_custom_call.1} parent=1 // pred_check_branch
      %156 = sbr.rel (0) target = $region33
    $region32: #{tpu_custom_call.1} parent=1 // pred_region
      %s158 = ssub.s32 128, 128
      %159 = vsyncadd [#allocation4], %s158
      %s161 = sshll.u32 [#allocation8], 4
      %s162 = int_to_ptr.vmem [resolvable:$true] %s161
      %164 = dma.vmem_to_hbm [thread:$0]  %s162, 128, %s4, [#allocation4]
    $region33: #{tpu_custom_call.1} parent=1 // pred_fallthru
      _
    // Predicated region
    $region34: #{tpu_custom_call.1} parent=1 // pred_check
      _
    $region35: #{tpu_custom_call.1} parent=1 // pred_check_branch
      %166 = sbr.rel (0) target = $region37
    $region36: #{tpu_custom_call.1} parent=1 // pred_region
      %167 = dma.done [#allocation4], 128
    $region37: #{tpu_custom_call.1} parent=1 // pred_fallthru
      _
    %168 = vsyncpa [#allocation3], 1
    %169 = vsyncpa [#allocation6], 1
    %170 = vsyncpa [#allocation4], 1

</llo_original>
